<compile_context>
chip_gen: v7x
topology: tpu7x:2x2x1
jax: 0.10.0
libtpu: 0.0.40
codegen_flags: <defaults>
</compile_context>

<pallas_src>
import functools

import jax
import jax.numpy as jnp
from jax.experimental import pallas as pl
from jax.experimental.pallas import tpu as pltpu


def _round_up(x, m):
    return ((x + m - 1) // m) * m


def _vmem_capacity_bytes():
    """Physical VMEM per TensorCore (≈128 MiB on v5e/v6e, 64 MiB on v7x)."""
    try:
        info = pltpu.get_tpu_info()
    except Exception:
        return 64 * 2**20
    for name in ("vmem_capacity_bytes", "vmem_size_bytes", "vmem_bytes"):
        v = getattr(info, name, None)
        if v:
            return int(v)
    return 64 * 2**20


# ----------------------------------------------------------------------------
# Kernel 1 (primary): fused LightGCN propagation, layers resident in VMEM.
#   emb0 = concat(user_emb, item_emb)             (N_pad, F_pad), zero-padded
#   for l in range(n_layers):
#       emb = adj @ emb
#       emb = (1 - alpha) * emb + alpha * emb0    (if alpha > 0)
#   out = mean over {emb0, emb_1, ..., emb_L}
# ----------------------------------------------------------------------------
def _propagate_fused_kernel(emb0_seed_ref, emb0_res_ref, adj_ref, out_ref,
                            acc_ref, embbuf_ref, mean_ref,
                            *, n_layers, alpha, tm, tk, adj_resident):
    l = pl.program_id(0)
    i = pl.program_id(1)
    k = pl.program_id(2)
    nk = pl.num_programs(2)

    row = pl.multiple_of(i * tm, tm)
    col = pl.multiple_of(k * tk, tk)

    # Tile-by-tile seeding (no whole-array one-shot load): during the first
    # layer's first row tile the k loop walks every (tk, F_pad) emb0 block,
    # seeding the resident bf16 layer buffer and the f32 running layer-sum.
    @pl.when((l == 0) & (i == 0))
    def _():
        e0 = emb0_seed_ref[...]                                  # (tk, F_pad) f32
        embbuf_ref[0, pl.ds(col, tk), :] = e0.astype(embbuf_ref.dtype)
        mean_ref[pl.ds(col, tk), :] = e0

    @pl.when(k == 0)
    def _():
        acc_ref[...] = jnp.zeros_like(acc_ref)

    cur = l & 1
    rhs = embbuf_ref[cur, pl.ds(col, tk), :]                     # (tk, F_pad) bf16
    if adj_resident:
        a_tile = adj_ref[pl.ds(row, tm), pl.ds(col, tk)]         # resident adj
    else:
        a_tile = adj_ref[...]                                    # streamed tile
    acc_ref[...] += jnp.dot(a_tile, rhs, preferred_element_type=jnp.float32)

    def _layer_rows():
        nr = acc_ref[...]                                        # f32
        if alpha > 0:
            # Residual kept in f32 (v5e VPU has no bf16 path).
            nr = (1.0 - alpha) * nr + alpha * emb0_res_ref[...]
        return nr

    # Intermediate layers: only update the resident VMEM buffers (no HBM store).
    @pl.when((k == nk - 1) & (l < n_layers - 1))
    def _():
        nr = _layer_rows()
        embbuf_ref[1 - cur, pl.ds(row, tm), :] = nr.astype(embbuf_ref.dtype)
        mean_ref[pl.ds(row, tm), :] = mean_ref[pl.ds(row, tm), :] + nr

    # Final layer: fuse residual + layer mean + 1/(L+1) scale; store once.
    @pl.when((k == nk - 1) & (l == n_layers - 1))
    def _():
        mean_rows = mean_ref[pl.ds(row, tm), :] + _layer_rows()
        out_ref[...] = (mean_rows * (1.0 / (n_layers + 1))).astype(out_ref.dtype)


def lightgcn_propagate_fused(adj_bf16, ego_f32, n_layers, alpha, tm, tk,
                             adj_resident, vmem_limit):
    n_pad, f_pad = ego_f32.shape
    assert adj_bf16.shape == (n_pad, n_pad)
    assert n_pad % tm == 0 and n_pad % tk == 0 and n_layers >= 1

    def seed_map(l, i, k):
        # Only walk the emb0 blocks during the seeding phase; constant block
        # index otherwise, so the pipeline does not re-DMA emb0 every step.
        return (jnp.where((l == 0) & (i == 0), k, 0), 0)

    if adj_resident:
        # Adjacency DMA'd once and kept resident across all layers.
        adj_spec = pl.BlockSpec((n_pad, n_pad), lambda l, i, k: (0, 0))
    else:
        # Streamed tiles, 3-deep buffered to hide the k==last epilogue bubble.
        adj_spec = pl.BlockSpec((tm, tk), lambda l, i, k: (i, k),
                                pipeline_mode=pl.Buffered(3))

    kernel = functools.partial(_propagate_fused_kernel, n_layers=n_layers,
                               alpha=float(alpha), tm=tm, tk=tk,
                               adj_resident=adj_resident)
    grid = (n_layers, n_pad // tm, n_pad // tk)
    return pl.pallas_call(
        kernel,
        out_shape=jax.ShapeDtypeStruct((n_pad, f_pad), jnp.float32),
        grid_spec=pltpu.PrefetchScalarGridSpec(
            num_scalar_prefetch=0,
            grid=grid,
            in_specs=[
                pl.BlockSpec((tk, f_pad), seed_map),              # emb0 seed view
                pl.BlockSpec((tm, f_pad), lambda l, i, k: (i, 0)),  # emb0 residual view
                adj_spec,                                          # adjacency (bf16)
            ],
            out_specs=pl.BlockSpec((tm, f_pad), lambda l, i, k: (i, 0)),
            scratch_shapes=[
                pltpu.VMEM((tm, f_pad), jnp.float32),            # matmul accumulator
                pltpu.VMEM((2, n_pad, f_pad), jnp.bfloat16),     # ping-pong layer embeddings
                pltpu.VMEM((n_pad, f_pad), jnp.float32),         # running sum over layers
            ],
        ),
        compiler_params=pltpu.CompilerParams(
            # Layers are sequential and every row tile of layer l+1 reads all
            # row tiles of layer l through the resident scratch, so no axis of
            # this fused call can be megacore-sharded.
            dimension_semantics=("arbitrary", "arbitrary", "arbitrary"),
            vmem_limit_bytes=int(vmem_limit),
        ),
    )(ego_f32, ego_f32, adj_bf16)


# ----------------------------------------------------------------------------
# Kernel 2 (fallback / megacore path): one propagation layer per pallas_call.
# Inter-layer embeddings stay in HBM; row axis is "parallel" so v7x can split
# the adjacency stream across both TensorCores.
# ----------------------------------------------------------------------------
def _propagate_layer_kernel(embk_ref, emb0_ref, adj_ref, out_ref, acc_ref, *, alpha):
    k = pl.program_id(1)
    nk = pl.num_programs(1)

    @pl.when(k == 0)
    def _():
        acc_ref[...] = jnp.zeros_like(acc_ref)

    acc_ref[...] += jnp.dot(adj_ref[...], embk_ref[...],
                            preferred_element_type=jnp.float32)

    @pl.when(k == nk - 1)
    def _():
        nr = acc_ref[...]
        if alpha > 0:
            nr = (1.0 - alpha) * nr + alpha * emb0_ref[...]
        out_ref[...] = nr.astype(out_ref.dtype)


def lightgcn_propagate_layer(adj_bf16, emb_bf16, ego_f32, alpha, tm, tk, vmem_limit):
    n_pad, f_pad = ego_f32.shape
    kernel = functools.partial(_propagate_layer_kernel, alpha=float(alpha))
    # TODO(synk): emb_bf16 is re-streamed once per row tile (~25% extra HBM
    # bytes at tm=512); could be made call-resident when it fits VMEM.
    return pl.pallas_call(
        kernel,
        out_shape=jax.ShapeDtypeStruct((n_pad, f_pad), jnp.float32),
        grid_spec=pltpu.PrefetchScalarGridSpec(
            num_scalar_prefetch=0,
            grid=(n_pad // tm, n_pad // tk),
            in_specs=[
                pl.BlockSpec((tk, f_pad), lambda i, k: (k, 0)),   # layer input (bf16)
                pl.BlockSpec((tm, f_pad), lambda i, k: (i, 0)),   # emb0 residual (f32)
                pl.BlockSpec((tm, tk), lambda i, k: (i, k),
                             pipeline_mode=pl.Buffered(3)),        # adjacency (bf16)
            ],
            out_specs=pl.BlockSpec((tm, f_pad), lambda i, k: (i, 0)),
            scratch_shapes=[pltpu.VMEM((tm, f_pad), jnp.float32)],
        ),
        compiler_params=pltpu.CompilerParams(
            dimension_semantics=("parallel", "arbitrary"),
            vmem_limit_bytes=int(vmem_limit),
        ),
    )(emb_bf16, ego_f32, adj_bf16)


# ----------------------------------------------------------------------------
# LightGCN module (parameters + forward) in JAX, hot path in Pallas.
# ----------------------------------------------------------------------------
class LightGCN:
    def __init__(self, n_users, n_items, n_factors, n_layers, norm_adj,
                 alpha=0.2, dropout=0, key=None, propagate_mode="auto"):
        self.n_users = n_users
        self.n_items = n_items
        self.n_factors = n_factors
        self.n_layers = n_layers
        self.alpha = alpha
        self.dropout = dropout  # TODO(synk): dropout unused in forward (eval-path parity with the reference).

        self.n_nodes = n_users + n_items
        self.f_pad = _round_up(n_factors, 128)       # lane-dense factor dim

        # --- Tiling ---------------------------------------------------------
        if self.n_nodes <= 1024:
            self.n_pad = _round_up(self.n_nodes, 128)
            self.tm = self.tk = self.n_pad
        else:
            self.n_pad = _round_up(self.n_nodes, 512)
            self.tm = 512
            # Larger contraction tiles amortize the ~0.35us per-grid-step
            # overhead (matters most with v7x's 3.2 TB/s HBM); used only when
            # they divide n_pad so row padding stays <= 511.
            self.tk = 2048 if self.n_pad % 2048 == 0 else (
                1024 if self.n_pad % 1024 == 0 else 512)

        # --- VMEM budgeting / propagation-path selection ---------------------
        phys = _vmem_capacity_bytes()                 # 128 MiB v5e/v6e, 64 MiB v7x
        budget = min(max(int(0.85 * phys), 32 * 2**20), 125 * 2**20)
        f = self.f_pad
        fused_base = (2 * self.tk * f * 4             # emb0 seed view (double buffered)
                      + 2 * self.tm * f * 4           # emb0 residual view
                      + 2 * self.tm * f * 4           # output tile (double buffered)
                      + self.tm * f * 4               # matmul accumulator scratch
                      + 2 * self.n_pad * f * 2        # ping-pong layer embeddings (bf16)
                      + self.n_pad * f * 4)           # running layer-sum (f32)
        adj_bytes = 2 * self.n_pad * self.n_pad       # bf16 adjacency
        adj_stream_bytes = 3 * self.tm * self.tk * 2  # Buffered(3) streamed tiles
        # Resident adjacency -> read once instead of n_layers x.  Constant-index
        # BlockSpec inputs are still double-buffered, hence the 2x accounting.
        self._adj_resident = (fused_base + 2 * adj_bytes) <= budget
        fused_bytes = fused_base + (2 * adj_bytes if self._adj_resident
                                    else adj_stream_bytes)
        if propagate_mode == "auto":
            # Guard: fall back to per-layer calls (HBM-resident inter-layer
            # embeddings) when the fused resident scratch would not fit VMEM.
            # TODO(synk): on v7x it can pay to force "per_layer" even when the
            # fused path fits, to split the adjacency stream across both TCs.
            self._mode = "fused" if fused_bytes <= budget else "per_layer"
        else:
            self._mode = propagate_mode
        self._vmem_limit = budget

        # --- Adjacency --------------------------------------------------------
        adj = jnp.asarray(norm_adj, jnp.float32)
        self.norm_adj = adj
        adj_pad = jnp.zeros((self.n_pad, self.n_pad), jnp.float32)
        adj_pad = adj_pad.at[:self.n_nodes, :self.n_nodes].set(adj)
        # bf16 halves the dominant HBM stream; accumulation stays f32 on the MXU.
        # TODO(synk): optional int8 (v5e/v6e) / fp8 (v7x) adjacency with per-row
        # scales would halve it again; kept bf16 to stay close to the f32 model.
        self._adj_bf16 = adj_pad.astype(jnp.bfloat16)

        # --- Parameters -------------------------------------------------------
        key = key if key is not None else jax.random.PRNGKey(0)
        ku, ki = jax.random.split(key)
        # nn.init.normal_(std=0.05)
        self.user_embedding = 0.05 * jax.random.normal(ku, (n_users, n_factors), jnp.float32)
        self.item_embedding = 0.05 * jax.random.normal(ki, (n_items, n_factors), jnp.float32)
        # nn.init.zeros_
        self.user_bias = jnp.zeros((n_users, 1), jnp.float32)
        self.item_bias = jnp.zeros((n_items, 1), jnp.float32)
        self.global_bias = jnp.float32(3.53)

    def _get_ego_embeddings(self):
        return jnp.concatenate([self.user_embedding, self.item_embedding], axis=0)

    def _propagate(self, ego_pad):
        if self.n_layers == 0:
            return ego_pad
        if self._mode == "fused":
            return lightgcn_propagate_fused(self._adj_bf16, ego_pad, self.n_layers,
                                            self.alpha, self.tm, self.tk,
                                            self._adj_resident, self._vmem_limit)
        # Per-layer fallback / megacore path.
        acc = ego_pad
        emb = ego_pad.astype(jnp.bfloat16)
        for _ in range(self.n_layers):
            new = lightgcn_propagate_layer(self._adj_bf16, emb, ego_pad,
                                           self.alpha, self.tm, self.tk,
                                           self._vmem_limit)
            acc = acc + new
            emb = new.astype(jnp.bfloat16)
        return acc * (1.0 / (self.n_layers + 1))

    def forward(self, users, items):
        users = jnp.asarray(users, jnp.int32)
        items = jnp.asarray(items, jnp.int32)

        ego = self._get_ego_embeddings()                               # (N, F)
        ego_pad = jnp.zeros((self.n_pad, self.f_pad), jnp.float32)
        ego_pad = ego_pad.at[:self.n_nodes, :self.n_factors].set(ego)  # zero-padded (inert)

        all_emb = self._propagate(ego_pad)                             # (N_pad, F_pad)

        user_all = all_emb[:self.n_users, :self.n_factors]
        item_all = all_emb[self.n_users:self.n_nodes, :self.n_factors]

        # Rating head in plain JAX (perf review: tiny batch -> launch-overhead
        # dominated; avoids padded transpose copies of (F_pad, B_pad) arrays).
        ue = user_all[users]                                           # (B, F)
        ie = item_all[items]                                           # (B, F)
        ub = self.user_bias[users, 0]                                  # (B,)
        ib = self.item_bias[items, 0]                                  # (B,)
        interaction = jnp.sum(ue * ie, axis=1)
        return self.global_bias + ub + ib + interaction                # (B,)

    __call__ = forward


def build_norm_adj(key, n_users, n_items):
    """Symmetric normalized bipartite adjacency D^-1/2 A D^-1/2 (dense)."""
    n = n_users + n_items
    r = (jax.random.uniform(key, (n_users, n_items)) < 0.3).astype(jnp.float32)
    adj = jnp.zeros((n, n), jnp.float32)
    adj = adj.at[:n_users, n_users:].set(r)
    adj = adj.at[n_users:, :n_users].set(r.T)
    deg = jnp.sum(adj, axis=1)
    d_inv_sqrt = jnp.where(deg > 0, 1.0 / jnp.sqrt(jnp.maximum(deg, 1e-12)), 0.0)
    return d_inv_sqrt[:, None] * adj * d_inv_sqrt[None, :]


def _reference_forward_f32(model, users, items):
    """Pure-JAX f32 reference mirroring the PyTorch LightGCN semantics."""
    ego = jnp.concatenate([model.user_embedding, model.item_embedding], axis=0)
    emb = ego
    acc = ego
    for _ in range(model.n_layers):
        emb = model.norm_adj @ emb
        if model.alpha > 0:
            emb = (1.0 - model.alpha) * emb + model.alpha * ego
        acc = acc + emb
    mean_emb = acc / (model.n_layers + 1)
    u_all = mean_emb[:model.n_users]
    i_all = mean_emb[model.n_users:]
    ue, ie = u_all[users], i_all[items]
    ub = model.user_bias[users, 0]
    ib = model.item_bias[items, 0]
    return model.global_bias + ub + ib + jnp.sum(ue * ie, axis=1)


if __name__ == "__main__":
    n_users, n_items, n_factors, n_layers = 12, 20, 32, 2
    batch = 8

    root = jax.random.PRNGKey(0)
    k_adj, k_params, k_u, k_i = jax.random.split(root, 4)

    norm_adj = build_norm_adj(k_adj, n_users, n_items)
    users = jax.random.randint(k_u, (batch,), 0, n_users, dtype=jnp.int32)
    items = jax.random.randint(k_i, (batch,), 0, n_items, dtype=jnp.int32)

    model = LightGCN(n_users, n_items, n_factors, n_layers, norm_adj,
                     alpha=0.2, dropout=0, key=k_params)

    ref = _reference_forward_f32(model, users, items)

    # 1) Fused path (resident adjacency) — the default for this graph size.
    ratings = model(users, items)
    jax.block_until_ready(ratings)
    assert ratings.shape == (batch,)
    assert jnp.allclose(ratings, ref, atol=5e-3, rtol=1e-3), (ratings, ref)

    # 2) Fused path with the streamed-adjacency pipeline (exercise Buffered(3)).
    model._adj_resident = False
    ratings_stream = model(users, items)
    jax.block_until_ready(ratings_stream)
    assert jnp.allclose(ratings_stream, ref, atol=5e-3, rtol=1e-3)
    assert jnp.allclose(ratings_stream, ratings, atol=1e-4)

    # 3) Per-layer fallback path (megacore-parallel row axis).
    model._mode = "per_layer"
    ratings_pl = model(users, items)
    jax.block_until_ready(ratings_pl)
    assert jnp.allclose(ratings_pl, ref, atol=5e-3, rtol=1e-3)
    assert jnp.allclose(ratings_pl, ratings, atol=1e-4)

    print("KERNEL_OK")
</pallas_src>

<mosaic_0001>
module attributes {stable_mosaic.version = 11 : i64} {
  func.func @_propagate_fused_kernel(%arg0: i32, %arg1: i32, %arg2: i32, %arg3: memref<128x128xf32, #tpu.memory_space<vmem>>, %arg4: memref<128x128xf32, #tpu.memory_space<vmem>>, %arg5: memref<128x128xbf16, #tpu.memory_space<vmem>>, %arg6: memref<128x128xf32, #tpu.memory_space<vmem>>, %arg7: memref<128x128xf32, #tpu.memory_space<vmem>>, %arg8: memref<2x128x128xbf16, #tpu.memory_space<vmem>>, %arg9: memref<128x128xf32, #tpu.memory_space<vmem>>) attributes {dimension_semantics = [#tpu.dimension_semantics<arbitrary>, #tpu.dimension_semantics<arbitrary>, #tpu.dimension_semantics<arbitrary>], iteration_bounds = array<i64: 2, 1, 1>, scalar_prefetch = 0 : i64, scratch_operands = 3 : i64, tpu.core_type = #tpu.core_type<tc>, window_params = [{transform_indices = @transform_0, window_bounds = array<i64: 128, 128>}, {transform_indices = @transform_1, window_bounds = array<i64: 128, 128>}, {pipeline_mode = #tpu.pipeline_mode<synchronous>, transform_indices = @transform_2, window_bounds = array<i64: 128, 128>}, {transform_indices = @transform_3, window_bounds = array<i64: 128, 128>}]} {
    %c128_i32 = arith.constant 128 : i32
    %0 = arith.muli %arg1, %c128_i32 : i32
    %1 = tpu.assume_multiple %0, 128 : i32
    %c128_i32_0 = arith.constant 128 : i32
    %2 = arith.muli %arg2, %c128_i32_0 : i32
    %3 = tpu.assume_multiple %2, 128 : i32
    %c0_i32 = arith.constant 0 : i32
    %4 = arith.cmpi eq, %arg0, %c0_i32 : i32
    %c0_i32_1 = arith.constant 0 : i32
    %5 = arith.cmpi eq, %arg1, %c0_i32_1 : i32
    %6 = arith.andi %4, %5 : i1
    %7 = arith.extui %6 : i1 to i32
    %c0_i32_2 = arith.constant 0 : i32
    %8 = arith.cmpi ne, %7, %c0_i32_2 : i32
    scf.if %8 {
      %c0_15 = arith.constant 0 : index
      %c0_16 = arith.constant 0 : index
      %34 = vector.load %arg3[%c0_15, %c0_16] : memref<128x128xf32, #tpu.memory_space<vmem>>, vector<128x128xf32>
      %35 = arith.truncf %34 : vector<128x128xf32> to vector<128x128xbf16>
      %c0_17 = arith.constant 0 : index
      %36 = arith.index_cast %3 : i32 to index
      %c0_18 = arith.constant 0 : index
      %37 = vector.load %arg8[%c0_17, %36, %c0_18] : memref<2x128x128xbf16, #tpu.memory_space<vmem>>, vector<1x128x128xbf16>
      %38 = vector.shape_cast %37 : vector<1x128x128xbf16> to vector<128x128xbf16>
      %39 = vector.shape_cast %35 : vector<128x128xbf16> to vector<1x128x128xbf16>
      tpu.vector_store %arg8[%c0_17, %36, %c0_18], %39 {strides = array<i32>} : memref<2x128x128xbf16, #tpu.memory_space<vmem>>, vector<1x128x128xbf16>,
      %40 = arith.index_cast %3 : i32 to index
      %c0_19 = arith.constant 0 : index
      %41 = vector.load %arg9[%40, %c0_19] : memref<128x128xf32, #tpu.memory_space<vmem>>, vector<128x128xf32>
      tpu.vector_store %arg9[%40, %c0_19], %34 {strides = array<i32>} : memref<128x128xf32, #tpu.memory_space<vmem>>, vector<128x128xf32>,
    } else {
    }
    %c0_i32_3 = arith.constant 0 : i32
    %9 = arith.cmpi eq, %arg2, %c0_i32_3 : i32
    %10 = arith.extui %9 : i1 to i32
    %c0_i32_4 = arith.constant 0 : i32
    %11 = arith.cmpi ne, %10, %c0_i32_4 : i32
    scf.if %11 {
      %cst_15 = arith.constant 0.000000e+00 : f32
      %34 = vector.broadcast %cst_15 : f32 to vector<128x128xf32>
      %c0_16 = arith.constant 0 : index
      %c0_17 = arith.constant 0 : index
      %35 = vector.load %arg7[%c0_16, %c0_17] : memref<128x128xf32, #tpu.memory_space<vmem>>, vector<128x128xf32>
      tpu.vector_store %arg7[%c0_16, %c0_17], %34 {strides = array<i32>} : memref<128x128xf32, #tpu.memory_space<vmem>>, vector<128x128xf32>,
    } else {
    }
    %c1_i32 = arith.constant 1 : i32
    %12 = arith.andi %arg0, %c1_i32 : i32
    %13 = arith.index_cast %12 : i32 to index
    %14 = arith.index_cast %3 : i32 to index
    %c0 = arith.constant 0 : index
    %15 = vector.load %arg8[%13, %14, %c0] : memref<2x128x128xbf16, #tpu.memory_space<vmem>>, vector<1x128x128xbf16>
    %16 = vector.shape_cast %15 : vector<1x128x128xbf16> to vector<128x128xbf16>
    %17 = arith.index_cast %1 : i32 to index
    %18 = arith.index_cast %3 : i32 to index
    %19 = vector.load %arg5[%17, %18] : memref<128x128xbf16, #tpu.memory_space<vmem>>, vector<128x128xbf16>
    %c0_5 = arith.constant 0 : index
    %c0_6 = arith.constant 0 : index
    %20 = vector.load %arg7[%c0_5, %c0_6] : memref<128x128xf32, #tpu.memory_space<vmem>>, vector<128x128xf32>
    %cst = arith.constant dense<0.000000e+00> : vector<128x128xf32>
    %21 = tpu.matmul %19, %16, %cst {dimension_numbers = #tpu.dot_dimension_numbers<[1], [0], [0], [1], [0, 0, 1, 1], [], []>} : vector<128x128xbf16>, vector<128x128xbf16>, vector<128x128xf32> -> vector<128x128xf32>
    %22 = arith.addf %20, %21 : vector<128x128xf32>
    %c0_7 = arith.constant 0 : index
    %c0_8 = arith.constant 0 : index
    %23 = vector.load %arg7[%c0_7, %c0_8] : memref<128x128xf32, #tpu.memory_space<vmem>>, vector<128x128xf32>
    tpu.vector_store %arg7[%c0_7, %c0_8], %22 {strides = array<i32>} : memref<128x128xf32, #tpu.memory_space<vmem>>, vector<128x128xf32>,
    %c0_i32_9 = arith.constant 0 : i32
    %24 = arith.cmpi eq, %arg2, %c0_i32_9 : i32
    %c1_i32_10 = arith.constant 1 : i32
    %25 = arith.cmpi slt, %arg0, %c1_i32_10 : i32
    %26 = arith.andi %24, %25 : i1
    %27 = arith.extui %26 : i1 to i32
    %c0_i32_11 = arith.constant 0 : i32
    %28 = arith.cmpi ne, %27, %c0_i32_11 : i32
    scf.if %28 {
      %c0_15 = arith.constant 0 : index
      %c0_16 = arith.constant 0 : index
      %34 = vector.load %arg7[%c0_15, %c0_16] : memref<128x128xf32, #tpu.memory_space<vmem>>, vector<128x128xf32>
      %cst_17 = arith.constant 8.000000e-01 : f32
      %35 = vector.broadcast %cst_17 : f32 to vector<128x128xf32>
      %36 = arith.mulf %35, %34 : vector<128x128xf32>
      %c0_18 = arith.constant 0 : index
      %c0_19 = arith.constant 0 : index
      %37 = vector.load %arg4[%c0_18, %c0_19] : memref<128x128xf32, #tpu.memory_space<vmem>>, vector<128x128xf32>
      %cst_20 = arith.constant 2.000000e-01 : f32
      %38 = vector.broadcast %cst_20 : f32 to vector<128x128xf32>
      %39 = arith.mulf %38, %37 : vector<128x128xf32>
      %40 = arith.addf %36, %39 : vector<128x128xf32>
      %41 = arith.truncf %40 : vector<128x128xf32> to vector<128x128xbf16>
      %c1_i32_21 = arith.constant 1 : i32
      %42 = arith.subi %c1_i32_21, %12 : i32
      %43 = arith.index_cast %42 : i32 to index
      %44 = arith.index_cast %1 : i32 to index
      %c0_22 = arith.constant 0 : index
      %45 = vector.load %arg8[%43, %44, %c0_22] : memref<2x128x128xbf16, #tpu.memory_space<vmem>>, vector<1x128x128xbf16>
      %46 = vector.shape_cast %45 : vector<1x128x128xbf16> to vector<128x128xbf16>
      %47 = vector.shape_cast %41 : vector<128x128xbf16> to vector<1x128x128xbf16>
      tpu.vector_store %arg8[%43, %44, %c0_22], %47 {strides = array<i32>} : memref<2x128x128xbf16, #tpu.memory_space<vmem>>, vector<1x128x128xbf16>,
      %48 = arith.index_cast %1 : i32 to index
      %c0_23 = arith.constant 0 : index
      %49 = vector.load %arg9[%48, %c0_23] : memref<128x128xf32, #tpu.memory_space<vmem>>, vector<128x128xf32>
      %50 = arith.addf %49, %40 : vector<128x128xf32>
      %51 = arith.index_cast %1 : i32 to index
      %c0_24 = arith.constant 0 : index
      %52 = vector.load %arg9[%51, %c0_24] : memref<128x128xf32, #tpu.memory_space<vmem>>, vector<128x128xf32>
      tpu.vector_store %arg9[%51, %c0_24], %50 {strides = array<i32>} : memref<128x128xf32, #tpu.memory_space<vmem>>, vector<128x128xf32>,
    } else {
    }
    %c0_i32_12 = arith.constant 0 : i32
    %29 = arith.cmpi eq, %arg2, %c0_i32_12 : i32
    %c1_i32_13 = arith.constant 1 : i32
    %30 = arith.cmpi eq, %arg0, %c1_i32_13 : i32
    %31 = arith.andi %29, %30 : i1
    %32 = arith.extui %31 : i1 to i32
    %c0_i32_14 = arith.constant 0 : i32
    %33 = arith.cmpi ne, %32, %c0_i32_14 : i32
    scf.if %33 {
      %34 = arith.index_cast %1 : i32 to index
      %c0_15 = arith.constant 0 : index
      %35 = vector.load %arg9[%34, %c0_15] : memref<128x128xf32, #tpu.memory_space<vmem>>, vector<128x128xf32>
      %c0_16 = arith.constant 0 : index
      %c0_17 = arith.constant 0 : index
      %36 = vector.load %arg7[%c0_16, %c0_17] : memref<128x128xf32, #tpu.memory_space<vmem>>, vector<128x128xf32>
      %cst_18 = arith.constant 8.000000e-01 : f32
      %37 = vector.broadcast %cst_18 : f32 to vector<128x128xf32>
      %38 = arith.mulf %37, %36 : vector<128x128xf32>
      %c0_19 = arith.constant 0 : index
      %c0_20 = arith.constant 0 : index
      %39 = vector.load %arg4[%c0_19, %c0_20] : memref<128x128xf32, #tpu.memory_space<vmem>>, vector<128x128xf32>
      %cst_21 = arith.constant 2.000000e-01 : f32
      %40 = vector.broadcast %cst_21 : f32 to vector<128x128xf32>
      %41 = arith.mulf %40, %39 : vector<128x128xf32>
      %42 = arith.addf %38, %41 : vector<128x128xf32>
      %43 = arith.addf %35, %42 : vector<128x128xf32>
      %cst_22 = arith.constant 0.333333343 : f32
      %44 = vector.broadcast %cst_22 : f32 to vector<128x128xf32>
      %45 = arith.mulf %43, %44 : vector<128x128xf32>
      %c0_23 = arith.constant 0 : index
      %c0_24 = arith.constant 0 : index
      %46 = vector.load %arg6[%c0_23, %c0_24] : memref<128x128xf32, #tpu.memory_space<vmem>>, vector<128x128xf32>
      tpu.vector_store %arg6[%c0_23, %c0_24], %45 {strides = array<i32>} : memref<128x128xf32, #tpu.memory_space<vmem>>, vector<128x128xf32>,
    } else {
    }
    return
  }
  func.func @transform_0(%arg0: i32, %arg1: i32, %arg2: i32) -> (i32, i32) {
    %c0_i32 = arith.constant 0 : i32
    %0 = arith.cmpi eq, %arg0, %c0_i32 : i32
    %c0_i32_0 = arith.constant 0 : i32
    %1 = arith.cmpi eq, %arg1, %c0_i32_0 : i32
    %2 = arith.andi %0, %1 : i1
    %c0_i32_1 = arith.constant 0 : i32
    %3 = arith.select %2, %arg2, %c0_i32_1 : i32
    %c0_i32_2 = arith.constant 0 : i32
    %c0_i32_3 = arith.constant 0 : i32
    return %3, %c0_i32_2 : i32, i32
  }
  func.func @transform_1(%arg0: i32, %arg1: i32, %arg2: i32) -> (i32, i32) {
    %c0_i32 = arith.constant 0 : i32
    %c0_i32_0 = arith.constant 0 : i32
    return %arg1, %c0_i32 : i32, i32
  }
  func.func @transform_2(%arg0: i32, %arg1: i32, %arg2: i32) -> (i32, i32) {
    %c0_i32 = arith.constant 0 : i32
    %c0_i32_0 = arith.constant 0 : i32
    %c0_i32_1 = arith.constant 0 : i32
    return %c0_i32, %c0_i32_0 : i32, i32
  }
  func.func @transform_3(%arg0: i32, %arg1: i32, %arg2: i32) -> (i32, i32) {
    %c0_i32 = arith.constant 0 : i32
    %c0_i32_0 = arith.constant 0 : i32
    return %arg1, %c0_i32 : i32, i32
  }
}

</mosaic_0001>

<llo_original>
// kernel: tpu_custom_call.1
$region0: #{tpu_custom_call.1}
  #allocation0 [shape = 'u32[]', space=smem, size = 0x4, offset = 0x4, fixed_abs, tag = 'smem constant byte address 0x4 - core index']
  #allocation1 [shape = 'u32[144,128]{1,0:T(1,128)}', space=vmem, size = 0x12000, scoped, tag = 'internal scratch']
  #allocation2 [shape = 'f32[128,128]{1,0:T(8,128)}', space=vmem, size = 0x10000, scoped, tag = 'scratch operand']
  #allocation3 [shape = 'bf16[2,128,128]{2,1,0:T(16,128)(2,1)}', space=vmem, size = 0x10000, scoped, tag = 'scratch operand']
  #allocation4 [shape = 'f32[128,128]{1,0:T(8,128)}', space=vmem, size = 0x10000, scoped, tag = 'scratch operand']
  %s0 = inlined_call_operand.hbm [shape: f32[128,128], index: 0, kind: input, shape index: {}]
  %s1 = inlined_call_operand.hbm [shape: f32[128,128], index: 1, kind: input, shape index: {}]
  %s2 = inlined_call_operand.hbm [shape: bf16[128,128], index: 2, kind: input, shape index: {}]
  %s3 = inlined_call_operand.hbm [shape: f32[128,128], index: 3, kind: output, shape index: {}]
  %s4 = sld [smem:[#allocation0]]
  $region73: #{tpu_custom_call.1} parent=0
    _
  %s6 = ssub.s32 1, %s4
  %s7 = scalar_select 0, %s6, %s4
  $region1: #{tpu_custom_call.1} parent=0
    #allocation5 [shape = 'u8[131072]{0}', space=vmem, size = 0x20000, scoped, tag = 'input window, operand 0']
    #allocation6 [shape = 's32[2]{0}', space=sflag, size = 0x8, scoped, tag = 'scoped memory for tpu_custom_call.1']
    #allocation7 [shape = 's32[2]{0}', space=sflag, size = 0x8, scoped, tag = 'scoped memory for tpu_custom_call.1']
    #allocation8 [shape = 'u8[65536]{0}', space=vmem, size = 0x10000, scoped, tag = 'input window, operand 1, single buffered']
    #allocation9 [shape = 's32[1]{0}', space=sflag, size = 0x4, scoped, tag = 'scoped memory for tpu_custom_call.1']
    #allocation10 [shape = 'u8[32768]{0}', space=vmem, size = 0x8000, scoped, tag = 'input window, operand 2, single buffered']
    #allocation11 [shape = 'u8[65536]{0}', space=vmem, size = 0x10000, scoped, tag = 'output window, operand 0, single buffered']
    %8 = vsyncpa [#allocation6], 0
    %s9 = scalar_lea.sflag [#allocation6], 1
    %10 = vsyncpa %s9, 0
    %11 = vsyncpa [#allocation9], 0
    %12 = vsyncpa [#allocation7], 0
    loop: start=0, step=1, limit=4
    $region2: #{tpu_custom_call.1} parent=1 // loop_pre_header
      _
    $region3: #{tpu_custom_call.1} parent=1 // loop_header
      %s14 = sphi 0, %s18
      %p15 = scmp.ge.s32.totalorder %s14, 4
      %s21 = sphi 0, %s40
      %s22 = sphi 0, %s36
      %s23 = sphi 0, %s32
      %s24 = sphi 0, %s21
      %s25 = sphi 0, %s22
      %s26 = sphi 0, %s23
      %s27 = sphi 0, %s24
      %s28 = sphi 0, %s25
      %s29 = sphi 0, %s26
      %s53 = sphi 0, %s55
      %s56 = sphi 0, %s53
      %s57 = sphi 0, %s56
      %s73 = sphi 0, %s57
      %s79 = sphi 0, %s81
      %s82 = sphi 0, %s79
      %s83 = sphi 0, %s82
      %s99 = sphi 0, %s83
      %s103 = sphi 0, %s103
      %s105 = sphi 0, %s103
      %s106 = sphi 0, %s105
      %s120 = sphi 0, %s106
      %s126 = sphi 0, %s128
      %s129 = sphi 0, %s126
      %s130 = sphi 0, %s129
      %s146 = sphi 0, %s130
    $region4: #{tpu_custom_call.1} parent=1 // loop_header_branch
      %17 = sbr.rel (%p15) target = $region8
    $region5: #{tpu_custom_call.1} parent=1 // loop_body
      %s19 = ssub.s32 %s14, 1
      %s20 = ssub.s32 %s14, 2
      %s30 = sadd.s32 1, %s23
      %p31 = scmp.ge.s32.totalorder %s30, 1
      %s32 = scalar_select %p31, 0, %s30
      %s33 = sadd.s32 1, %s22
      %s34 = scalar_select %p31, %s33, %s22
      %p35 = scmp.ge.s32.totalorder %s34, 1
      %s36 = scalar_select %p35, 0, %s34
      %s37 = sadd.s32 1, %s21
      %s38 = scalar_select %p35, %s37, %s21
      %p39 = scmp.ge.s32.totalorder %s38, 2
      %s40 = scalar_select %p39, 0, %s38
      %p41 = scmp.eq.s32.totalorder %s21, 0
      %p42 = scmp.eq.s32.totalorder %s22, 0
      %p43 = pnand %p41, %p42
      %p44 = pneg %p43
      %s45 = scalar_select %p44, %s23, 0
      %p46 = scmp.eq.s32.totalorder %s40, 0
      %p47 = scmp.eq.s32.totalorder %s36, 0
      %p48 = pnand %p46, %p47
      %p49 = pneg %p48
      %s50 = scalar_select %p49, %s32, 0
      %s51 = ssub.s32 %s45, %s50
      %p52 = scmp.eq.s32.totalorder %s51, 0
      %s54 = sadd.s32 %s53, 1
      %s55 = scalar_select %p52, %s53, %s54
      %p58 = pneg %p52
      %p59 = scmp.eq.s32.totalorder %s14, 1
      %p60 = por %p58, %p59
      %p61 = scmp.ne.s32.totalorder %s53, %s56
      %p62 = scmp.eq.s32.totalorder %s14, 0
      %p63 = por %p61, %p62
      %p64 = scmp.ne.s32.totalorder %s53, %s56
      %p65 = scmp.eq.s32.totalorder %s19, 1
      %p66 = por %p64, %p65
      %p67 = scmp.ne.s32.totalorder %s56, %s57
      %p68 = scmp.eq.s32.totalorder %s19, 0
      %p69 = por %p67, %p68
      %p70 = scmp.ne.s32.totalorder %s56, %s57
      %p71 = scmp.eq.s32.totalorder %s20, 1
      %p72 = por %p70, %p71
      %p74 = scmp.ne.s32.totalorder %s57, %s73
      %p75 = scmp.eq.s32.totalorder %s20, 0
      %p76 = por %p74, %p75
      %s77 = ssub.s32 %s22, %s36
      %p78 = scmp.eq.s32.totalorder %s77, 0
      %s80 = sadd.s32 %s79, 1
      %s81 = scalar_select %p78, %s79, %s80
      %p84 = pneg %p78
      %p85 = scmp.eq.s32.totalorder %s14, 1
      %p86 = por %p84, %p85
      %p87 = scmp.ne.s32.totalorder %s79, %s82
      %p88 = scmp.eq.s32.totalorder %s14, 0
      %p89 = por %p87, %p88
      %p90 = scmp.ne.s32.totalorder %s79, %s82
      %p91 = scmp.eq.s32.totalorder %s19, 1
      %p92 = por %p90, %p91
      %p93 = scmp.ne.s32.totalorder %s82, %s83
      %p94 = scmp.eq.s32.totalorder %s19, 0
      %p95 = por %p93, %p94
      %p96 = scmp.ne.s32.totalorder %s82, %s83
      %p97 = scmp.eq.s32.totalorder %s20, 1
      %p98 = por %p96, %p97
      %p100 = scmp.ne.s32.totalorder %s83, %s99
      %p101 = scmp.eq.s32.totalorder %s20, 0
      %p102 = por %p100, %p101
      %s104 = sadd.s32 %s103, 1
      %p107 = scmp.eq.s32.totalorder %s14, 1
      %p108 = scmp.ne.s32.totalorder %s103, %s105
      %p109 = scmp.eq.s32.totalorder %s14, 0
      %p110 = por %p108, %p109
      %p111 = scmp.ne.s32.totalorder %s103, %s105
      %p112 = scmp.eq.s32.totalorder %s19, 1
      %p113 = por %p111, %p112
      %p114 = scmp.ne.s32.totalorder %s105, %s106
      %p115 = scmp.eq.s32.totalorder %s19, 0
      %p116 = por %p114, %p115
      %p117 = scmp.ne.s32.totalorder %s105, %s106
      %p118 = scmp.eq.s32.totalorder %s20, 1
      %p119 = por %p117, %p118
      %p121 = scmp.ne.s32.totalorder %s106, %s120
      %p122 = scmp.eq.s32.totalorder %s20, 0
      %p123 = por %p121, %p122
      %s124 = ssub.s32 %s22, %s36
      %p125 = scmp.eq.s32.totalorder %s124, 0
      %s127 = sadd.s32 %s126, 1
      %s128 = scalar_select %p125, %s126, %s127
      %p131 = pneg %p125
      %p132 = scmp.eq.s32.totalorder %s14, 1
      %p133 = por %p131, %p132
      %p134 = scmp.ne.s32.totalorder %s126, %s129
      %p135 = scmp.eq.s32.totalorder %s14, 0
      %p136 = por %p134, %p135
      %p137 = scmp.ne.s32.totalorder %s126, %s129
      %p138 = scmp.eq.s32.totalorder %s19, 1
      %p139 = por %p137, %p138
      %p140 = scmp.ne.s32.totalorder %s129, %s130
      %p141 = scmp.eq.s32.totalorder %s19, 0
      %p142 = por %p140, %p141
      %p143 = scmp.ne.s32.totalorder %s129, %s130
      %p144 = scmp.eq.s32.totalorder %s20, 1
      %p145 = por %p143, %p144
      %p147 = scmp.ne.s32.totalorder %s130, %s146
      %p148 = scmp.eq.s32.totalorder %s20, 0
      %p149 = por %p147, %p148
      %p150 = scmp.le.s32.totalorder 1, %s14
      %p151 = scmp.lt.s32.totalorder %s14, 3
      %p152 = pnand %p150, %p151
      %p153 = pneg %p152
      // Predicated region
      $region9: #{tpu_custom_call.1} parent=5 // pred_check
        _
      $region10: #{tpu_custom_call.1} parent=5 // pred_check_branch
        %155 = sbr.rel (%p152) target = $region12
      $region11: #{tpu_custom_call.1} parent=5 // pred_region
        %s156 = ssub.s32 %s14, 1
        // Predicated region
        $region13: #{tpu_custom_call.1} parent=11 // pred_check
          %p157 = pneg %p95
        $region14: #{tpu_custom_call.1} parent=11 // pred_check_branch
          %159 = sbr.rel (%p157) target = $region16
        $region15: #{tpu_custom_call.1} parent=11 // pred_region
          %s160 = smul.u32 16, %s25
          %s162 = ssub.s32 2048, 2048
          %163 = vsyncadd [#allocation9], %s162
          %s164 = smul.addr %s160, 128
          %s165 = scalar_lea.hbm %s1, %s164
          %s166 = sshll.u32 [#allocation8], 4
          %s167 = int_to_ptr.vmem [resolvable:$true] %s166
          %172 = dma.hbm_to_vmem [thread:$0]  %s165, 2048, %s167, [#allocation9], 128, 128, 8
        $region16: #{tpu_custom_call.1} parent=11 // pred_fallthru
          _
        // Predicated region
        $region17: #{tpu_custom_call.1} parent=11 // pred_check
          %p173 = pneg %p116
        $region18: #{tpu_custom_call.1} parent=11 // pred_check_branch
          %175 = sbr.rel (%p173) target = $region20
        $region19: #{tpu_custom_call.1} parent=11 // pred_region
          %s177 = ssub.s32 1024, 1024
          %178 = vsyncadd [#allocation9], %s177
          %s179 = sshll.u32 [#allocation10], 4
          %s180 = int_to_ptr.vmem [resolvable:$true] %s179
          %185 = dma.hbm_to_vmem [thread:$0]  %s2, 1024, %s180, [#allocation9], 64, 64, 4
        $region20: #{tpu_custom_call.1} parent=11 // pred_fallthru
          _
      $region12: #{tpu_custom_call.1} parent=5 // pred_fallthru
        _
      %p186 = scmp.lt.s32.totalorder %s14, 2
      // Predicated region
      $region21: #{tpu_custom_call.1} parent=5 // pred_check
        %p187 = pneg %p186
      $region22: #{tpu_custom_call.1} parent=5 // pred_check_branch
        %189 = sbr.rel (%p187) target = $region24
      $region23: #{tpu_custom_call.1} parent=5 // pred_region
        // Predicated region
        $region25: #{tpu_custom_call.1} parent=23 // pred_check
          %p190 = pneg %p63
        $region26: #{tpu_custom_call.1} parent=23 // pred_check_branch
          %192 = sbr.rel (%p190) target = $region28
        $region27: #{tpu_custom_call.1} parent=23 // pred_region
          %s193 = sand.u32 %s53, 1
          %s194 = scalar_lea.sflag [#allocation6], %s193
          %s195 = sand.u32 %s53, 1
          %s196 = smul.addr %s195, 128
          %s197 = scalar_lea.vmem [#allocation5], %s196
          %p198 = scmp.eq.s32.totalorder %s21, 0
          %p199 = scmp.eq.s32.totalorder %s22, 0
          %p200 = pnand %p198, %p199
          %p201 = pneg %p200
          %s202 = scalar_select %p201, %s23, 0
          %s203 = smul.u32 16, %s202
          %s205 = ssub.s32 2048, 2048
          %206 = vsyncadd %s194, %s205
          %s207 = smul.addr %s203, 128
          %s208 = scalar_lea.hbm %s0, %s207
          %s209 = sshll.u32 %s197, 4
          %s210 = int_to_ptr.vmem [resolvable:$true] %s209
          %215 = dma.hbm_to_vmem [thread:$0]  %s208, 2048, %s210, %s194, 128, 128, 8
        $region28: #{tpu_custom_call.1} parent=23 // pred_fallthru
          _
      $region24: #{tpu_custom_call.1} parent=5 // pred_fallthru
        _
      %p216 = scmp.le.s32.totalorder 1, %s14
      %p217 = scmp.lt.s32.totalorder %s14, 3
      %p218 = pnand %p216, %p217
      %p219 = pneg %p218
      // Predicated region
      $region29: #{tpu_custom_call.1} parent=5 // pred_check
        _
      $region30: #{tpu_custom_call.1} parent=5 // pred_check_branch
        %221 = sbr.rel (%p218) target = $region32
      $region31: #{tpu_custom_call.1} parent=5 // pred_region
        %s222 = ssub.s32 %s14, 1
        %s223 = sand.u32 %s56, 1
        %s224 = scalar_lea.sflag [#allocation6], %s223
        %s225 = sand.u32 %s56, 1
        %s226 = smul.addr %s225, 128
        %s227 = scalar_lea.vmem [#allocation5], %s226
        // Predicated region
        $region33: #{tpu_custom_call.1} parent=31 // pred_check
          %p228 = pneg %p69
        $region34: #{tpu_custom_call.1} parent=31 // pred_check_branch
          %230 = sbr.rel (%p228) target = $region36
        $region35: #{tpu_custom_call.1} parent=31 // pred_region
          %231 = dma.done %s224, 2048
        $region36: #{tpu_custom_call.1} parent=31 // pred_fallthru
          _
        // Predicated region
        $region37: #{tpu_custom_call.1} parent=31 // pred_check
          %p232 = pneg %p95
        $region38: #{tpu_custom_call.1} parent=31 // pred_check_branch
          %234 = sbr.rel (%p232) target = $region40
        $region39: #{tpu_custom_call.1} parent=31 // pred_region
          %235 = dma.done [#allocation9], 2048
        $region40: #{tpu_custom_call.1} parent=31 // pred_fallthru
          _
        // Predicated region
        $region41: #{tpu_custom_call.1} parent=31 // pred_check
          %p236 = pneg %p116
        $region42: #{tpu_custom_call.1} parent=31 // pred_check_branch
          %238 = sbr.rel (%p236) target = $region44
        $region43: #{tpu_custom_call.1} parent=31 // pred_region
          %239 = dma.done [#allocation9], 1024
        $region44: #{tpu_custom_call.1} parent=31 // pred_fallthru
          _
        %s240 = sand.u32 %s56, 1
        %s241 = scalar_lea.sflag [#allocation6], %s240
        %s242 = sand.u32 %s56, 1
        %s243 = smul.addr %s242, 128
        %s244 = scalar_lea.vmem [#allocation5], %s243
        %p245 = pneg %p69
        %p246 = pneg %p66
        %p247 = pneg %p95
        %p248 = pneg %p92
        %p249 = pneg %p116
        %p250 = pneg %p113
        %p251 = pneg %p142
        %p252 = pneg %p139
        %p253 = scmp.eq.s32.totalorder %s24, 0
        %p254 = scmp.eq.s32.totalorder %s25, 0
        %p255 = pnand %p253, %p254
        %p256 = pneg %p255
        %s257 = scalar_select %p256, %s26, 0
        %s258 = smul.u32 16, %s257
        %s259 = smul.u32 16, %s25
        %s260 = smul.u32 16, %s25
        %s262 = smul.u32 %s25, 128
        %s263 = smul.u32 %s26, 128
        %p264 = scmp.eq.s32.totalorder %s24, 0
        %p265 = scmp.eq.s32.totalorder %s25, 0
        %p266 = pnand %p264, %p265
        %p267 = pneg %p266
        // Predicated region
        $region45: #{tpu_custom_call.1} parent=31 // pred_check
          _
        $region46: #{tpu_custom_call.1} parent=31 // pred_check_branch
          %269 = sbr.rel (%p266) target = $region48
        $region47: #{tpu_custom_call.1} parent=31 // pred_region
          %v270 = vld [vmem:[%s227] sm:$0xff]
          %v271 = vld [vmem:[%s227 + $0x8] sm:$0xff]
          %v272 = vld [vmem:[%s227 + $0x10] sm:$0xff]
          %v273 = vld [vmem:[%s227 + $0x18] sm:$0xff]
          %v274 = vld [vmem:[%s227 + $0x20] sm:$0xff]
          %v275 = vld [vmem:[%s227 + $0x28] sm:$0xff]
          %v276 = vld [vmem:[%s227 + $0x30] sm:$0xff]
          %v277 = vld [vmem:[%s227 + $0x38] sm:$0xff]
          %v278 = vld [vmem:[%s227 + $0x40] sm:$0xff]
          %v279 = vld [vmem:[%s227 + $0x48] sm:$0xff]
          %v280 = vld [vmem:[%s227 + $0x50] sm:$0xff]
          %v281 = vld [vmem:[%s227 + $0x58] sm:$0xff]
          %v282 = vld [vmem:[%s227 + $0x60] sm:$0xff]
          %v283 = vld [vmem:[%s227 + $0x68] sm:$0xff]
          %v284 = vld [vmem:[%s227 + $0x70] sm:$0xff]
          %v285 = vld [vmem:[%s227 + $0x78] sm:$0xff]
          %v286 = vpack.c.bf16 %v271, %v270
          %v287 = vpack.c.bf16 %v273, %v272
          %v288 = vpack.c.bf16 %v275, %v274
          %v289 = vpack.c.bf16 %v277, %v276
          %v290 = vpack.c.bf16 %v279, %v278
          %v291 = vpack.c.bf16 %v281, %v280
          %v292 = vpack.c.bf16 %v283, %v282
          %v293 = vpack.c.bf16 %v285, %v284
          %s294 = sshra.s32 %s263, 4
          %s295 = sand.u32 %s263, 15
          %s296 = smul.addr %s294, 8
          %s297 = scalar_lea.vmem [#allocation3], %s296
          %298 = vst [vmem:[%s297] sm:$0xff] %v286
          %299 = vst [vmem:[%s297 + $0x8] sm:$0xff] %v287
          %300 = vst [vmem:[%s297 + $0x10] sm:$0xff] %v288
          %301 = vst [vmem:[%s297 + $0x18] sm:$0xff] %v289
          %302 = vst [vmem:[%s297 + $0x20] sm:$0xff] %v290
          %303 = vst [vmem:[%s297 + $0x28] sm:$0xff] %v291
          %304 = vst [vmem:[%s297 + $0x30] sm:$0xff] %v292
          %305 = vst [vmem:[%s297 + $0x38] sm:$0xff] %v293
          %s306 = scalar_lea.vmem [#allocation4], %s263
          %307 = vst [vmem:[%s306] sm:$0xff] %v270
          %308 = vst [vmem:[%s306 + $0x8] sm:$0xff] %v271
          %309 = vst [vmem:[%s306 + $0x10] sm:$0xff] %v272
          %310 = vst [vmem:[%s306 + $0x18] sm:$0xff] %v273
          %311 = vst [vmem:[%s306 + $0x20] sm:$0xff] %v274
          %312 = vst [vmem:[%s306 + $0x28] sm:$0xff] %v275
          %313 = vst [vmem:[%s306 + $0x30] sm:$0xff] %v276
          %314 = vst [vmem:[%s306 + $0x38] sm:$0xff] %v277
          %315 = vst [vmem:[%s306 + $0x40] sm:$0xff] %v278
          %316 = vst [vmem:[%s306 + $0x48] sm:$0xff] %v279
          %317 = vst [vmem:[%s306 + $0x50] sm:$0xff] %v280
          %318 = vst [vmem:[%s306 + $0x58] sm:$0xff] %v281
          %319 = vst [vmem:[%s306 + $0x60] sm:$0xff] %v282
          %320 = vst [vmem:[%s306 + $0x68] sm:$0xff] %v283
          %321 = vst [vmem:[%s306 + $0x70] sm:$0xff] %v284
          %322 = vst [vmem:[%s306 + $0x78] sm:$0xff] %v285
        $region48: #{tpu_custom_call.1} parent=31 // pred_fallthru
          _
        %p323 = scmp.eq.s32.totalorder %s26, 0
        // Predicated region
        $region49: #{tpu_custom_call.1} parent=31 // pred_check
          %p324 = pneg %p323
        $region50: #{tpu_custom_call.1} parent=31 // pred_check_branch
          %326 = sbr.rel (%p324) target = $region52
        $region51: #{tpu_custom_call.1} parent=31 // pred_region
          %327 = vst [vmem:[#allocation2] sm:$0xff] 0.0
          %328 = vst [vmem:[#allocation2 + $0x8] sm:$0xff] 0.0
          %329 = vst [vmem:[#allocation2 + $0x10] sm:$0xff] 0.0
          %330 = vst [vmem:[#allocation2 + $0x18] sm:$0xff] 0.0
          %331 = vst [vmem:[#allocation2 + $0x20] sm:$0xff] 0.0
          %332 = vst [vmem:[#allocation2 + $0x28] sm:$0xff] 0.0
          %333 = vst [vmem:[#allocation2 + $0x30] sm:$0xff] 0.0
          %334 = vst [vmem:[#allocation2 + $0x38] sm:$0xff] 0.0
          %335 = vst [vmem:[#allocation2 + $0x40] sm:$0xff] 0.0
          %336 = vst [vmem:[#allocation2 + $0x48] sm:$0xff] 0.0
          %337 = vst [vmem:[#allocation2 + $0x50] sm:$0xff] 0.0
          %338 = vst [vmem:[#allocation2 + $0x58] sm:$0xff] 0.0
          %339 = vst [vmem:[#allocation2 + $0x60] sm:$0xff] 0.0
          %340 = vst [vmem:[#allocation2 + $0x68] sm:$0xff] 0.0
          %341 = vst [vmem:[#allocation2 + $0x70] sm:$0xff] 0.0
          %342 = vst [vmem:[#allocation2 + $0x78] sm:$0xff] 0.0
        $region52: #{tpu_custom_call.1} parent=31 // pred_fallthru
          _
        %s343 = sand.u32 %s24, 1
        %s344 = sshra.s32 %s263, 4
        %s345 = sand.u32 %s263, 15
        %s346 = smul.u32 %s343, 8
        %s347 = sadd.s32 %s344, %s346
        %s348 = smul.addr %s347, 8
        %s349 = scalar_lea.vmem [#allocation3], %s348
        %v350 = vld [vmem:[%s349] sm:$0xff]
        %v351 = vld [vmem:[%s349 + $0x8] sm:$0xff]
        %v352 = vld [vmem:[%s349 + $0x10] sm:$0xff]
        %v353 = vld [vmem:[%s349 + $0x18] sm:$0xff]
        %v354 = vld [vmem:[%s349 + $0x20] sm:$0xff]
        %v355 = vld [vmem:[%s349 + $0x28] sm:$0xff]
        %v356 = vld [vmem:[%s349 + $0x30] sm:$0xff]
        %v357 = vld [vmem:[%s349 + $0x38] sm:$0xff]
        %s358 = sshra.s32 %s263, 7
        %s359 = sand.u32 %s263, 127
        %s360 = sshra.s32 %s262, 3
        %s361 = sand.u32 %s262, 7
        %s362 = sadd.s32 %s358, %s360
        %s363 = smul.addr %s362, 4
        %s364 = scalar_lea.vmem [#allocation10], %s363
        %v365 = vld [vmem:[%s364] sm:$0xf]
        %v366 = vld [vmem:[%s364 + $0x4] sm:$0xf]
        %v367 = vld [vmem:[%s364 + $0x8] sm:$0xf]
        %v368 = vld [vmem:[%s364 + $0xc] sm:$0xf]
        %v369 = vld [vmem:[%s364 + $0x10] sm:$0xf]
        %v370 = vld [vmem:[%s364 + $0x14] sm:$0xf]
        %v371 = vld [vmem:[%s364 + $0x18] sm:$0xf]
        %v372 = vld [vmem:[%s364 + $0x1c] sm:$0xf]
        %v373 = vld [vmem:[%s364 + $0x20] sm:$0xf]
        %v374 = vld [vmem:[%s364 + $0x24] sm:$0xf]
        %v375 = vld [vmem:[%s364 + $0x28] sm:$0xf]
        %v376 = vld [vmem:[%s364 + $0x2c] sm:$0xf]
        %v377 = vld [vmem:[%s364 + $0x30] sm:$0xf]
        %v378 = vld [vmem:[%s364 + $0x34] sm:$0xf]
        %v379 = vld [vmem:[%s364 + $0x38] sm:$0xf]
        %v380 = vld [vmem:[%s364 + $0x3c] sm:$0xf]
        %v381 = vld [vmem:[#allocation2] sm:$0xff]
        %v382 = vld [vmem:[#allocation2 + $0x8] sm:$0xff]
        %v383 = vld [vmem:[#allocation2 + $0x10] sm:$0xff]
        %v384 = vld [vmem:[#allocation2 + $0x18] sm:$0xff]
        %v385 = vld [vmem:[#allocation2 + $0x20] sm:$0xff]
        %v386 = vld [vmem:[#allocation2 + $0x28] sm:$0xff]
        %v387 = vld [vmem:[#allocation2 + $0x30] sm:$0xff]
        %v388 = vld [vmem:[#allocation2 + $0x38] sm:$0xff]
        %v389 = vld [vmem:[#allocation2 + $0x40] sm:$0xff]
        %v390 = vld [vmem:[#allocation2 + $0x48] sm:$0xff]
        %v391 = vld [vmem:[#allocation2 + $0x50] sm:$0xff]
        %v392 = vld [vmem:[#allocation2 + $0x58] sm:$0xff]
        %v393 = vld [vmem:[#allocation2 + $0x60] sm:$0xff]
        %v394 = vld [vmem:[#allocation2 + $0x68] sm:$0xff]
        %v395 = vld [vmem:[#allocation2 + $0x70] sm:$0xff]
        %v396 = vld [vmem:[#allocation2 + $0x78] sm:$0xff]
        %v413 = vunpack.c.l.b16 %v365
        %v414 = vunpack.c.l.b16 %v366
        %v415 = vunpack.c.l.b16 %v367
        %v416 = vunpack.c.l.b16 %v368
        %v417 = vunpack.c.l.b16 %v369
        %v418 = vunpack.c.l.b16 %v370
        %v419 = vunpack.c.l.b16 %v371
        %v420 = vunpack.c.l.b16 %v372
        %v421 = vunpack.c.l.b16 %v373
        %v422 = vunpack.c.l.b16 %v374
        %v423 = vunpack.c.l.b16 %v375
        %v424 = vunpack.c.l.b16 %v376
        %v425 = vunpack.c.l.b16 %v377
        %v426 = vunpack.c.l.b16 %v378
        %v427 = vunpack.c.l.b16 %v379
        %v428 = vunpack.c.l.b16 %v380
        %v429 = vpack.c.b16 %v414, %v413
        %v430 = vpack.c.b16 %v416, %v415
        %v431 = vpack.c.b16 %v418, %v417
        %v432 = vpack.c.b16 %v420, %v419
        %v433 = vpack.c.b16 %v422, %v421
        %v434 = vpack.c.b16 %v424, %v423
        %v435 = vpack.c.b16 %v426, %v425
        %v436 = vpack.c.b16 %v428, %v427
        %445 = vmatprep.subr.bf16.mxu0 0
        %446 = vmatpush1.bf16.msra.mxu0 %v350
        %447 = vmatprep.subr.bf16.mxu0 0
        %448 = vmatpush1.bf16.msra.mxu0 %v351
        %449 = vmatprep.subr.bf16.mxu0 0
        %450 = vmatpush1.bf16.msra.mxu0 %v352
        %451 = vmatprep.subr.bf16.mxu0 0
        %452 = vmatpush1.bf16.msra.mxu0 %v353
        %453 = vmatprep.subr.bf16.mxu0 0
        %454 = vmatpush1.bf16.msra.mxu0 %v354
        %455 = vmatprep.subr.bf16.mxu0 0
        %456 = vmatpush1.bf16.msra.mxu0 %v355
        %457 = vmatprep.subr.bf16.mxu0 0
        %458 = vmatpush1.bf16.msra.mxu0 %v356
        %459 = vmatprep.subr.bf16.mxu0 0
        %460 = vmatpush1.bf16.msra.mxu0 %v357
        %461 = vmatprep.subr.bf16.mxu0 0
        %462 = vmatpush1.bf16.msra.mxu0 0
        %463 = vmatprep.subr.bf16.mxu0 0
        %464 = vmatpush1.bf16.msra.mxu0 0
        %465 = vmatprep.subr.bf16.mxu0 0
        %466 = vmatpush1.bf16.msra.mxu0 0
        %467 = vmatprep.subr.bf16.mxu0 0
        %468 = vmatpush1.bf16.msra.mxu0 0
        %469 = vmatprep.subr.bf16.mxu0 0
        %470 = vmatpush1.bf16.msra.mxu0 0
        %471 = vmatprep.subr.bf16.mxu0 0
        %472 = vmatpush1.bf16.msra.mxu0 0
        %473 = vmatprep.subr.bf16.mxu0 0
        %474 = vmatpush1.bf16.msra.mxu0 0
        %475 = vmatprep.subr.bf16.mxu0 0
        %476 = vmatpush1.bf16.msra.mxu0 0
        %477 = vmatprep.mubr.bf16.mxu0 0
        %478 = vmatmul.mubr.bf16.gmra.mrb[0].mxu0 %v429
        %v479 = vpop.f32.mrb[0].mxu0
        %v480 = vadd.f32 0.0, %v479
        %v481 = vpop.f32.mrb[0].mxu0
        %v482 = vpop.f32.mrb[0].mxu0
        %v483 = vadd.f32 0.0, %v482
        %v484 = vpop.f32.mrb[0].mxu0
        %485 = vmatprep.mubr.bf16.mxu0 0
        %486 = vmatmul.mubr.bf16.gmra.mrb[0].mxu0 %v430
        %v487 = vpop.f32.mrb[0].mxu0
        %v488 = vadd.f32 0.0, %v487
        %v489 = vpop.f32.mrb[0].mxu0
        %v490 = vpop.f32.mrb[0].mxu0
        %v491 = vadd.f32 0.0, %v490
        %v492 = vpop.f32.mrb[0].mxu0
        %493 = vmatprep.mubr.bf16.mxu0 0
        %494 = vmatmul.mubr.bf16.gmra.mrb[0].mxu0 %v431
        %v495 = vpop.f32.mrb[0].mxu0
        %v496 = vadd.f32 0.0, %v495
        %v497 = vpop.f32.mrb[0].mxu0
        %v498 = vpop.f32.mrb[0].mxu0
        %v499 = vadd.f32 0.0, %v498
        %v500 = vpop.f32.mrb[0].mxu0
        %501 = vmatprep.mubr.bf16.mxu0 0
        %502 = vmatmul.mubr.bf16.gmra.mrb[0].mxu0 %v432
        %v503 = vpop.f32.mrb[0].mxu0
        %v504 = vadd.f32 0.0, %v503
        %v505 = vpop.f32.mrb[0].mxu0
        %v506 = vpop.f32.mrb[0].mxu0
        %v507 = vadd.f32 0.0, %v506
        %v508 = vpop.f32.mrb[0].mxu0
        %509 = vmatprep.mubr.bf16.mxu0 0
        %510 = vmatmul.mubr.bf16.gmra.mrb[0].mxu0 %v433
        %v511 = vpop.f32.mrb[0].mxu0
        %v512 = vadd.f32 0.0, %v511
        %v513 = vpop.f32.mrb[0].mxu0
        %v514 = vpop.f32.mrb[0].mxu0
        %v515 = vadd.f32 0.0, %v514
        %v516 = vpop.f32.mrb[0].mxu0
        %517 = vmatprep.mubr.bf16.mxu0 0
        %518 = vmatmul.mubr.bf16.gmra.mrb[0].mxu0 %v434
        %v519 = vpop.f32.mrb[0].mxu0
        %v520 = vadd.f32 0.0, %v519
        %v521 = vpop.f32.mrb[0].mxu0
        %v522 = vpop.f32.mrb[0].mxu0
        %v523 = vadd.f32 0.0, %v522
        %v524 = vpop.f32.mrb[0].mxu0
        %525 = vmatprep.mubr.bf16.mxu0 0
        %526 = vmatmul.mubr.bf16.gmra.mrb[0].mxu0 %v435
        %v527 = vpop.f32.mrb[0].mxu0
        %v528 = vadd.f32 0.0, %v527
        %v529 = vpop.f32.mrb[0].mxu0
        %v530 = vpop.f32.mrb[0].mxu0
        %v531 = vadd.f32 0.0, %v530
        %v532 = vpop.f32.mrb[0].mxu0
        %533 = vmatprep.mubr.bf16.mxu0 0
        %534 = vmatmul.mubr.bf16.gmra.mrb[0].mxu0 %v436
        %v535 = vpop.f32.mrb[0].mxu0
        %v536 = vadd.f32 0.0, %v535
        %v537 = vpop.f32.mrb[0].mxu0
        %v538 = vpop.f32.mrb[0].mxu0
        %v539 = vadd.f32 0.0, %v538
        %v540 = vpop.f32.mrb[0].mxu0
        %541 = vdwg.mxu0
        %v542 = vadd.f32 %v381, %v480
        %v543 = vadd.f32 %v382, %v483
        %v544 = vadd.f32 %v383, %v488
        %v545 = vadd.f32 %v384, %v491
        %v546 = vadd.f32 %v385, %v496
        %v547 = vadd.f32 %v386, %v499
        %v548 = vadd.f32 %v387, %v504
        %v549 = vadd.f32 %v388, %v507
        %v550 = vadd.f32 %v389, %v512
        %v551 = vadd.f32 %v390, %v515
        %v552 = vadd.f32 %v391, %v520
        %v553 = vadd.f32 %v392, %v523
        %v554 = vadd.f32 %v393, %v528
        %v555 = vadd.f32 %v394, %v531
        %v556 = vadd.f32 %v395, %v536
        %v557 = vadd.f32 %v396, %v539
        %558 = vst [vmem:[#allocation2] sm:$0xff] %v542
        %559 = vst [vmem:[#allocation2 + $0x8] sm:$0xff] %v543
        %560 = vst [vmem:[#allocation2 + $0x10] sm:$0xff] %v544
        %561 = vst [vmem:[#allocation2 + $0x18] sm:$0xff] %v545
        %562 = vst [vmem:[#allocation2 + $0x20] sm:$0xff] %v546
        %563 = vst [vmem:[#allocation2 + $0x28] sm:$0xff] %v547
        %564 = vst [vmem:[#allocation2 + $0x30] sm:$0xff] %v548
        %565 = vst [vmem:[#allocation2 + $0x38] sm:$0xff] %v549
        %566 = vst [vmem:[#allocation2 + $0x40] sm:$0xff] %v550
        %567 = vst [vmem:[#allocation2 + $0x48] sm:$0xff] %v551
        %568 = vst [vmem:[#allocation2 + $0x50] sm:$0xff] %v552
        %569 = vst [vmem:[#allocation2 + $0x58] sm:$0xff] %v553
        %570 = vst [vmem:[#allocation2 + $0x60] sm:$0xff] %v554
        %571 = vst [vmem:[#allocation2 + $0x68] sm:$0xff] %v555
        %572 = vst [vmem:[#allocation2 + $0x70] sm:$0xff] %v556
        %573 = vst [vmem:[#allocation2 + $0x78] sm:$0xff] %v557
        %p574 = scmp.lt.s32.totalorder %s24, 1
        %p575 = pnand %p323, %p574
        %p576 = pneg %p575
        // Predicated region
        $region53: #{tpu_custom_call.1} parent=31 // pred_check
          _
        $region54: #{tpu_custom_call.1} parent=31 // pred_check_branch
          %578 = sbr.rel (%p575) target = $region56
        $region55: #{tpu_custom_call.1} parent=31 // pred_region
          %v579 = vld [vmem:[#allocation2] sm:$0xff]
          %v580 = vld [vmem:[#allocation2 + $0x8] sm:$0xff]
          %v581 = vld [vmem:[#allocation2 + $0x10] sm:$0xff]
          %v582 = vld [vmem:[#allocation2 + $0x18] sm:$0xff]
          %v583 = vld [vmem:[#allocation2 + $0x20] sm:$0xff]
          %v584 = vld [vmem:[#allocation2 + $0x28] sm:$0xff]
          %v585 = vld [vmem:[#allocation2 + $0x30] sm:$0xff]
          %v586 = vld [vmem:[#allocation2 + $0x38] sm:$0xff]
          %v587 = vld [vmem:[#allocation2 + $0x40] sm:$0xff]
          %v588 = vld [vmem:[#allocation2 + $0x48] sm:$0xff]
          %v589 = vld [vmem:[#allocation2 + $0x50] sm:$0xff]
          %v590 = vld [vmem:[#allocation2 + $0x58] sm:$0xff]
          %v591 = vld [vmem:[#allocation2 + $0x60] sm:$0xff]
          %v592 = vld [vmem:[#allocation2 + $0x68] sm:$0xff]
          %v593 = vld [vmem:[#allocation2 + $0x70] sm:$0xff]
          %v594 = vld [vmem:[#allocation2 + $0x78] sm:$0xff]
          %v595 = vmul.f32 %v579, 0.8
          %v596 = vmul.f32 %v580, 0.8
          %v597 = vmul.f32 %v581, 0.8
          %v598 = vmul.f32 %v582, 0.8
          %v599 = vmul.f32 %v583, 0.8
          %v600 = vmul.f32 %v584, 0.8
          %v601 = vmul.f32 %v585, 0.8
          %v602 = vmul.f32 %v586, 0.8
          %v603 = vmul.f32 %v587, 0.8
          %v604 = vmul.f32 %v588, 0.8
          %v605 = vmul.f32 %v589, 0.8
          %v606 = vmul.f32 %v590, 0.8
          %v607 = vmul.f32 %v591, 0.8
          %v608 = vmul.f32 %v592, 0.8
          %v609 = vmul.f32 %v593, 0.8
          %v610 = vmul.f32 %v594, 0.8
          %v611 = vld [vmem:[#allocation8] sm:$0xff]
          %v612 = vld [vmem:[#allocation8 + $0x8] sm:$0xff]
          %v613 = vld [vmem:[#allocation8 + $0x10] sm:$0xff]
          %v614 = vld [vmem:[#allocation8 + $0x18] sm:$0xff]
          %v615 = vld [vmem:[#allocation8 + $0x20] sm:$0xff]
          %v616 = vld [vmem:[#allocation8 + $0x28] sm:$0xff]
          %v617 = vld [vmem:[#allocation8 + $0x30] sm:$0xff]
          %v618 = vld [vmem:[#allocation8 + $0x38] sm:$0xff]
          %v619 = vld [vmem:[#allocation8 + $0x40] sm:$0xff]
          %v620 = vld [vmem:[#allocation8 + $0x48] sm:$0xff]
          %v621 = vld [vmem:[#allocation8 + $0x50] sm:$0xff]
          %v622 = vld [vmem:[#allocation8 + $0x58] sm:$0xff]
          %v623 = vld [vmem:[#allocation8 + $0x60] sm:$0xff]
          %v624 = vld [vmem:[#allocation8 + $0x68] sm:$0xff]
          %v625 = vld [vmem:[#allocation8 + $0x70] sm:$0xff]
          %v626 = vld [vmem:[#allocation8 + $0x78] sm:$0xff]
          %v627 = vmul.f32 %v611, 0.2
          %v628 = vmul.f32 %v612, 0.2
          %v629 = vmul.f32 %v613, 0.2
          %v630 = vmul.f32 %v614, 0.2
          %v631 = vmul.f32 %v615, 0.2
          %v632 = vmul.f32 %v616, 0.2
          %v633 = vmul.f32 %v617, 0.2
          %v634 = vmul.f32 %v618, 0.2
          %v635 = vmul.f32 %v619, 0.2
          %v636 = vmul.f32 %v620, 0.2
          %v637 = vmul.f32 %v621, 0.2
          %v638 = vmul.f32 %v622, 0.2
          %v639 = vmul.f32 %v623, 0.2
          %v640 = vmul.f32 %v624, 0.2
          %v641 = vmul.f32 %v625, 0.2
          %v642 = vmul.f32 %v626, 0.2
          %v643 = vadd.f32 %v595, %v627
          %v644 = vadd.f32 %v596, %v628
          %v645 = vadd.f32 %v597, %v629
          %v646 = vadd.f32 %v598, %v630
          %v647 = vadd.f32 %v599, %v631
          %v648 = vadd.f32 %v600, %v632
          %v649 = vadd.f32 %v601, %v633
          %v650 = vadd.f32 %v602, %v634
          %v651 = vadd.f32 %v603, %v635
          %v652 = vadd.f32 %v604, %v636
          %v653 = vadd.f32 %v605, %v637
          %v654 = vadd.f32 %v606, %v638
          %v655 = vadd.f32 %v607, %v639
          %v656 = vadd.f32 %v608, %v640
          %v657 = vadd.f32 %v609, %v641
          %v658 = vadd.f32 %v610, %v642
          %v659 = vpack.c.bf16 %v644, %v643
          %v660 = vpack.c.bf16 %v646, %v645
          %v661 = vpack.c.bf16 %v648, %v647
          %v662 = vpack.c.bf16 %v650, %v649
          %v663 = vpack.c.bf16 %v652, %v651
          %v664 = vpack.c.bf16 %v654, %v653
          %v665 = vpack.c.bf16 %v656, %v655
          %v666 = vpack.c.bf16 %v658, %v657
          %s667 = ssub.s32 1, %s343
          %s668 = sshra.s32 %s262, 4
          %s669 = sand.u32 %s262, 15
          %s670 = smul.u32 %s667, 8
          %s671 = sadd.s32 %s668, %s670
          %s672 = smul.addr %s671, 8
          %s673 = scalar_lea.vmem [#allocation3], %s672
          %674 = vst [vmem:[%s673] sm:$0xff] %v659
          %675 = vst [vmem:[%s673 + $0x8] sm:$0xff] %v660
          %676 = vst [vmem:[%s673 + $0x10] sm:$0xff] %v661
          %677 = vst [vmem:[%s673 + $0x18] sm:$0xff] %v662
          %678 = vst [vmem:[%s673 + $0x20] sm:$0xff] %v663
          %679 = vst [vmem:[%s673 + $0x28] sm:$0xff] %v664
          %680 = vst [vmem:[%s673 + $0x30] sm:$0xff] %v665
          %681 = vst [vmem:[%s673 + $0x38] sm:$0xff] %v666
          %s682 = scalar_lea.vmem [#allocation4], %s262
          %v683 = vld [vmem:[%s682] sm:$0xff]
          %v684 = vld [vmem:[%s682 + $0x8] sm:$0xff]
          %v685 = vld [vmem:[%s682 + $0x10] sm:$0xff]
          %v686 = vld [vmem:[%s682 + $0x18] sm:$0xff]
          %v687 = vld [vmem:[%s682 + $0x20] sm:$0xff]
          %v688 = vld [vmem:[%s682 + $0x28] sm:$0xff]
          %v689 = vld [vmem:[%s682 + $0x30] sm:$0xff]
          %v690 = vld [vmem:[%s682 + $0x38] sm:$0xff]
          %v691 = vld [vmem:[%s682 + $0x40] sm:$0xff]
          %v692 = vld [vmem:[%s682 + $0x48] sm:$0xff]
          %v693 = vld [vmem:[%s682 + $0x50] sm:$0xff]
          %v694 = vld [vmem:[%s682 + $0x58] sm:$0xff]
          %v695 = vld [vmem:[%s682 + $0x60] sm:$0xff]
          %v696 = vld [vmem:[%s682 + $0x68] sm:$0xff]
          %v697 = vld [vmem:[%s682 + $0x70] sm:$0xff]
          %v698 = vld [vmem:[%s682 + $0x78] sm:$0xff]
          %v699 = vadd.f32 %v683, %v643
          %v700 = vadd.f32 %v684, %v644
          %v701 = vadd.f32 %v685, %v645
          %v702 = vadd.f32 %v686, %v646
          %v703 = vadd.f32 %v687, %v647
          %v704 = vadd.f32 %v688, %v648
          %v705 = vadd.f32 %v689, %v649
          %v706 = vadd.f32 %v690, %v650
          %v707 = vadd.f32 %v691, %v651
          %v708 = vadd.f32 %v692, %v652
          %v709 = vadd.f32 %v693, %v653
          %v710 = vadd.f32 %v694, %v654
          %v711 = vadd.f32 %v695, %v655
          %v712 = vadd.f32 %v696, %v656
          %v713 = vadd.f32 %v697, %v657
          %v714 = vadd.f32 %v698, %v658
          %715 = vst [vmem:[%s682] sm:$0xff] %v699
          %716 = vst [vmem:[%s682 + $0x8] sm:$0xff] %v700
          %717 = vst [vmem:[%s682 + $0x10] sm:$0xff] %v701
          %718 = vst [vmem:[%s682 + $0x18] sm:$0xff] %v702
          %719 = vst [vmem:[%s682 + $0x20] sm:$0xff] %v703
          %720 = vst [vmem:[%s682 + $0x28] sm:$0xff] %v704
          %721 = vst [vmem:[%s682 + $0x30] sm:$0xff] %v705
          %722 = vst [vmem:[%s682 + $0x38] sm:$0xff] %v706
          %723 = vst [vmem:[%s682 + $0x40] sm:$0xff] %v707
          %724 = vst [vmem:[%s682 + $0x48] sm:$0xff] %v708
          %725 = vst [vmem:[%s682 + $0x50] sm:$0xff] %v709
          %726 = vst [vmem:[%s682 + $0x58] sm:$0xff] %v710
          %727 = vst [vmem:[%s682 + $0x60] sm:$0xff] %v711
          %728 = vst [vmem:[%s682 + $0x68] sm:$0xff] %v712
          %729 = vst [vmem:[%s682 + $0x70] sm:$0xff] %v713
          %730 = vst [vmem:[%s682 + $0x78] sm:$0xff] %v714
        $region56: #{tpu_custom_call.1} parent=31 // pred_fallthru
          _
        %p731 = scmp.eq.s32.totalorder %s24, 1
        %p732 = pnand %p323, %p731
        %p733 = pneg %p732
        // Predicated region
        $region57: #{tpu_custom_call.1} parent=31 // pred_check
          _
        $region58: #{tpu_custom_call.1} parent=31 // pred_check_branch
          %735 = sbr.rel (%p732) target = $region60
        $region59: #{tpu_custom_call.1} parent=31 // pred_region
          %s736 = scalar_lea.vmem [#allocation4], %s262
          %v737 = vld [vmem:[%s736] sm:$0xff]
          %v738 = vld [vmem:[%s736 + $0x8] sm:$0xff]
          %v739 = vld [vmem:[%s736 + $0x10] sm:$0xff]
          %v740 = vld [vmem:[%s736 + $0x18] sm:$0xff]
          %v741 = vld [vmem:[%s736 + $0x20] sm:$0xff]
          %v742 = vld [vmem:[%s736 + $0x28] sm:$0xff]
          %v743 = vld [vmem:[%s736 + $0x30] sm:$0xff]
          %v744 = vld [vmem:[%s736 + $0x38] sm:$0xff]
          %v745 = vld [vmem:[%s736 + $0x40] sm:$0xff]
          %v746 = vld [vmem:[%s736 + $0x48] sm:$0xff]
          %v747 = vld [vmem:[%s736 + $0x50] sm:$0xff]
          %v748 = vld [vmem:[%s736 + $0x58] sm:$0xff]
          %v749 = vld [vmem:[%s736 + $0x60] sm:$0xff]
          %v750 = vld [vmem:[%s736 + $0x68] sm:$0xff]
          %v751 = vld [vmem:[%s736 + $0x70] sm:$0xff]
          %v752 = vld [vmem:[%s736 + $0x78] sm:$0xff]
          %v753 = vld [vmem:[#allocation2] sm:$0xff]
          %v754 = vld [vmem:[#allocation2 + $0x8] sm:$0xff]
          %v755 = vld [vmem:[#allocation2 + $0x10] sm:$0xff]
          %v756 = vld [vmem:[#allocation2 + $0x18] sm:$0xff]
          %v757 = vld [vmem:[#allocation2 + $0x20] sm:$0xff]
          %v758 = vld [vmem:[#allocation2 + $0x28] sm:$0xff]
          %v759 = vld [vmem:[#allocation2 + $0x30] sm:$0xff]
          %v760 = vld [vmem:[#allocation2 + $0x38] sm:$0xff]
          %v761 = vld [vmem:[#allocation2 + $0x40] sm:$0xff]
          %v762 = vld [vmem:[#allocation2 + $0x48] sm:$0xff]
          %v763 = vld [vmem:[#allocation2 + $0x50] sm:$0xff]
          %v764 = vld [vmem:[#allocation2 + $0x58] sm:$0xff]
          %v765 = vld [vmem:[#allocation2 + $0x60] sm:$0xff]
          %v766 = vld [vmem:[#allocation2 + $0x68] sm:$0xff]
          %v767 = vld [vmem:[#allocation2 + $0x70] sm:$0xff]
          %v768 = vld [vmem:[#allocation2 + $0x78] sm:$0xff]
          %v769 = vmul.f32 %v753, 0.8
          %v770 = vmul.f32 %v754, 0.8
          %v771 = vmul.f32 %v755, 0.8
          %v772 = vmul.f32 %v756, 0.8
          %v773 = vmul.f32 %v757, 0.8
          %v774 = vmul.f32 %v758, 0.8
          %v775 = vmul.f32 %v759, 0.8
          %v776 = vmul.f32 %v760, 0.8
          %v777 = vmul.f32 %v761, 0.8
          %v778 = vmul.f32 %v762, 0.8
          %v779 = vmul.f32 %v763, 0.8
          %v780 = vmul.f32 %v764, 0.8
          %v781 = vmul.f32 %v765, 0.8
          %v782 = vmul.f32 %v766, 0.8
          %v783 = vmul.f32 %v767, 0.8
          %v784 = vmul.f32 %v768, 0.8
          %v785 = vld [vmem:[#allocation8] sm:$0xff]
          %v786 = vld [vmem:[#allocation8 + $0x8] sm:$0xff]
          %v787 = vld [vmem:[#allocation8 + $0x10] sm:$0xff]
          %v788 = vld [vmem:[#allocation8 + $0x18] sm:$0xff]
          %v789 = vld [vmem:[#allocation8 + $0x20] sm:$0xff]
          %v790 = vld [vmem:[#allocation8 + $0x28] sm:$0xff]
          %v791 = vld [vmem:[#allocation8 + $0x30] sm:$0xff]
          %v792 = vld [vmem:[#allocation8 + $0x38] sm:$0xff]
          %v793 = vld [vmem:[#allocation8 + $0x40] sm:$0xff]
          %v794 = vld [vmem:[#allocation8 + $0x48] sm:$0xff]
          %v795 = vld [vmem:[#allocation8 + $0x50] sm:$0xff]
          %v796 = vld [vmem:[#allocation8 + $0x58] sm:$0xff]
          %v797 = vld [vmem:[#allocation8 + $0x60] sm:$0xff]
          %v798 = vld [vmem:[#allocation8 + $0x68] sm:$0xff]
          %v799 = vld [vmem:[#allocation8 + $0x70] sm:$0xff]
          %v800 = vld [vmem:[#allocation8 + $0x78] sm:$0xff]
          %v801 = vmul.f32 %v785, 0.2
          %v802 = vmul.f32 %v786, 0.2
          %v803 = vmul.f32 %v787, 0.2
          %v804 = vmul.f32 %v788, 0.2
          %v805 = vmul.f32 %v789, 0.2
          %v806 = vmul.f32 %v790, 0.2
          %v807 = vmul.f32 %v791, 0.2
          %v808 = vmul.f32 %v792, 0.2
          %v809 = vmul.f32 %v793, 0.2
          %v810 = vmul.f32 %v794, 0.2
          %v811 = vmul.f32 %v795, 0.2
          %v812 = vmul.f32 %v796, 0.2
          %v813 = vmul.f32 %v797, 0.2
          %v814 = vmul.f32 %v798, 0.2
          %v815 = vmul.f32 %v799, 0.2
          %v816 = vmul.f32 %v800, 0.2
          %v817 = vadd.f32 %v769, %v801
          %v818 = vadd.f32 %v770, %v802
          %v819 = vadd.f32 %v771, %v803
          %v820 = vadd.f32 %v772, %v804
          %v821 = vadd.f32 %v773, %v805
          %v822 = vadd.f32 %v774, %v806
          %v823 = vadd.f32 %v775, %v807
          %v824 = vadd.f32 %v776, %v808
          %v825 = vadd.f32 %v777, %v809
          %v826 = vadd.f32 %v778, %v810
          %v827 = vadd.f32 %v779, %v811
          %v828 = vadd.f32 %v780, %v812
          %v829 = vadd.f32 %v781, %v813
          %v830 = vadd.f32 %v782, %v814
          %v831 = vadd.f32 %v783, %v815
          %v832 = vadd.f32 %v784, %v816
          %v833 = vadd.f32 %v737, %v817
          %v834 = vadd.f32 %v738, %v818
          %v835 = vadd.f32 %v739, %v819
          %v836 = vadd.f32 %v740, %v820
          %v837 = vadd.f32 %v741, %v821
          %v838 = vadd.f32 %v742, %v822
          %v839 = vadd.f32 %v743, %v823
          %v840 = vadd.f32 %v744, %v824
          %v841 = vadd.f32 %v745, %v825
          %v842 = vadd.f32 %v746, %v826
          %v843 = vadd.f32 %v747, %v827
          %v844 = vadd.f32 %v748, %v828
          %v845 = vadd.f32 %v749, %v829
          %v846 = vadd.f32 %v750, %v830
          %v847 = vadd.f32 %v751, %v831
          %v848 = vadd.f32 %v752, %v832
          %v849 = vmul.f32 %v833, 0.33333334
          %v850 = vmul.f32 %v834, 0.33333334
          %v851 = vmul.f32 %v835, 0.33333334
          %v852 = vmul.f32 %v836, 0.33333334
          %v853 = vmul.f32 %v837, 0.33333334
          %v854 = vmul.f32 %v838, 0.33333334
          %v855 = vmul.f32 %v839, 0.33333334
          %v856 = vmul.f32 %v840, 0.33333334
          %v857 = vmul.f32 %v841, 0.33333334
          %v858 = vmul.f32 %v842, 0.33333334
          %v859 = vmul.f32 %v843, 0.33333334
          %v860 = vmul.f32 %v844, 0.33333334
          %v861 = vmul.f32 %v845, 0.33333334
          %v862 = vmul.f32 %v846, 0.33333334
          %v863 = vmul.f32 %v847, 0.33333334
          %v864 = vmul.f32 %v848, 0.33333334
          %865 = vst [vmem:[#allocation11] sm:$0xff] %v849
          %866 = vst [vmem:[#allocation11 + $0x8] sm:$0xff] %v850
          %867 = vst [vmem:[#allocation11 + $0x10] sm:$0xff] %v851
          %868 = vst [vmem:[#allocation11 + $0x18] sm:$0xff] %v852
          %869 = vst [vmem:[#allocation11 + $0x20] sm:$0xff] %v853
          %870 = vst [vmem:[#allocation11 + $0x28] sm:$0xff] %v854
          %871 = vst [vmem:[#allocation11 + $0x30] sm:$0xff] %v855
          %872 = vst [vmem:[#allocation11 + $0x38] sm:$0xff] %v856
          %873 = vst [vmem:[#allocation11 + $0x40] sm:$0xff] %v857
          %874 = vst [vmem:[#allocation11 + $0x48] sm:$0xff] %v858
          %875 = vst [vmem:[#allocation11 + $0x50] sm:$0xff] %v859
          %876 = vst [vmem:[#allocation11 + $0x58] sm:$0xff] %v860
          %877 = vst [vmem:[#allocation11 + $0x60] sm:$0xff] %v861
          %878 = vst [vmem:[#allocation11 + $0x68] sm:$0xff] %v862
          %879 = vst [vmem:[#allocation11 + $0x70] sm:$0xff] %v863
          %880 = vst [vmem:[#allocation11 + $0x78] sm:$0xff] %v864
        $region60: #{tpu_custom_call.1} parent=31 // pred_fallthru
          _
        // Predicated region
        $region61: #{tpu_custom_call.1} parent=31 // pred_check
          %p881 = pneg %p139
        $region62: #{tpu_custom_call.1} parent=31 // pred_check_branch
          %883 = sbr.rel (%p881) target = $region64
        $region63: #{tpu_custom_call.1} parent=31 // pred_region
          %s884 = smul.u32 16, %s25
          %s886 = ssub.s32 2048, 2048
          %887 = vsyncadd [#allocation7], %s886
          %s888 = smul.addr %s884, 128
          %s889 = scalar_lea.hbm %s3, %s888
          %s890 = sshll.u32 [#allocation11], 4
          %s891 = int_to_ptr.vmem [resolvable:$true] %s890
          %896 = dma.vmem_to_hbm [thread:$0]  %s891, 2048, %s889, [#allocation7], 128, 128, 8
        $region64: #{tpu_custom_call.1} parent=31 // pred_fallthru
          _
        // Predicated region
        $region65: #{tpu_custom_call.1} parent=31 // pred_check
          %p897 = pneg %p139
        $region66: #{tpu_custom_call.1} parent=31 // pred_check_branch
          %899 = sbr.rel (%p897) target = $region68
        $region67: #{tpu_custom_call.1} parent=31 // pred_region
          %900 = dma.done [#allocation7], 2048
        $region68: #{tpu_custom_call.1} parent=31 // pred_fallthru
          _
      $region32: #{tpu_custom_call.1} parent=5 // pred_fallthru
        _
      %p901 = scmp.le.s32.totalorder 2, %s14
      // Predicated region
      $region69: #{tpu_custom_call.1} parent=5 // pred_check
        %p902 = pneg %p901
      $region70: #{tpu_custom_call.1} parent=5 // pred_check_branch
        %904 = sbr.rel (%p902) target = $region72
      $region71: #{tpu_custom_call.1} parent=5 // pred_region
        %s905 = ssub.s32 %s14, 2
      $region72: #{tpu_custom_call.1} parent=5 // pred_fallthru
        _
    $region6: #{tpu_custom_call.1} parent=1 // loop_footer
      %s18 = sadd.s32 1, %s14
    $region7: #{tpu_custom_call.1} parent=1 // loop_footer_branch
      %13 = sbr.rel target = $region3
    $region8: #{tpu_custom_call.1} parent=1 // loop_exit
      _
    %906 = vsyncpa [#allocation6], 1
    %s907 = scalar_lea.sflag [#allocation6], 1
    %908 = vsyncpa %s907, 1
    %909 = vsyncpa [#allocation9], 1
    %910 = vsyncpa [#allocation7], 1
    %s911 = scalar_lea.sflag [#allocation7], 1
    %912 = vsyncpa %s911, 1

</llo_original>
